<compile_context>
chip_gen: v5e
topology: v5e:2x2
jax: 0.10.0
libtpu: 0.0.40
codegen_flags: <defaults>
</compile_context>

<pallas_src>
import jax
import jax.numpy as jnp
from jax.experimental import pallas as pl
from jax.experimental.pallas import tpu as pltpu


def _round_up(x, m):
    return (x + m - 1) // m * m


def _two_mlp_head_kernel(x_ref, w6_ref, b6_ref, w7_ref, b7_ref, o_ref, acc_ref):
    """Fused fc6 -> ReLU -> fc7 -> ReLU for one (tm, rep) output tile.

    Grid = (row_tiles, k_tiles); axis 1 is the fc6 reduction ("arbitrary").
    """
    k = pl.program_id(1)

    @pl.when(k == 0)
    def _():
        acc_ref[...] = jnp.zeros_like(acc_ref)

    # fc6 partial product for this K slab.  x is streamed in its HBM dtype and
    # cast to the (bf16) weight dtype in-kernel (saves a full wrapper astype
    # pass over x); the MXU sees bf16 operands, accumulation stays f32.
    acc_ref[...] += jnp.dot(
        x_ref[...].astype(w6_ref.dtype), w6_ref[...],
        preferred_element_type=jnp.float32,
    )

    @pl.when(k == pl.num_programs(1) - 1)
    def _():
        # Epilogue in f32: bias + ReLU, then fc7 (bf16 MXU, f32 acc) + bias + ReLU.
        h = jnp.maximum(acc_ref[...] + b6_ref[...], 0.0)
        o = jnp.dot(h.astype(w7_ref.dtype), w7_ref[...],
                    preferred_element_type=jnp.float32)
        o = jnp.maximum(o + b7_ref[...], 0.0)
        o_ref[...] = o.astype(o_ref.dtype)


def _pick_tk(d_in, tk_max):
    """Pick a K tile that needs NO padding whenever possible.

    Returns (tk, k_pad).  k_pad == d_in unless d_in is both larger than tk_max
    and not a multiple of 128 (rare for ROI heads: C*H*W is usually 128-aligned).
    """
    if d_in <= tk_max:
        return d_in, d_in                       # single K step, no padding
    if d_in % 128 == 0:
        q = d_in // 128
        best = 128
        for m in range(1, q + 1):               # largest 128-multiple divisor <= tk_max
            if q % m == 0 and m * 128 <= tk_max:
                best = m * 128
        return best, d_in
    # Fallback: pad K (materializes padded copies of x and w6).
    tk = _round_up(min(tk_max, d_in), 128)
    return tk, _round_up(d_in, tk)


def two_mlp_head(x, w6, b6, w7, b7, *, compute_dtype=jnp.bfloat16,
                 out_dtype=None, tk_max=None):
    """x: (N, C, H, W) or (N, d_in).  w6: (d_in, rep), w7: (rep, rep).

    Weights should be pre-cast to `compute_dtype` once at load time (they are
    static) so the per-call path does zero weight copies.  Returns (N, rep)
    in x.dtype unless `out_dtype` is given.
    """
    n = x.shape[0]
    x2 = x.reshape(n, -1)                       # flatten(start_dim=1)  (glue)
    d_in = x2.shape[1]
    rep = w6.shape[1]
    assert w6.shape[0] == d_in and w7.shape == (rep, rep)
    assert b6.shape == (rep,) and b7.shape == (rep,)
    assert rep % 128 == 0, "representation_size must be a multiple of 128"
    out_dtype = jnp.dtype(x.dtype if out_dtype is None else out_dtype)

    # ---- per-TensorCore VMEM capacity (64 MiB on v7x, 128 MiB on v5e/v6e) ----
    vmem_phys = 64 << 20                        # conservative default (v7x)
    try:
        info = pltpu.get_tpu_info()
        vmem_phys = int(getattr(info, "vmem_capacity_bytes", vmem_phys))
    except Exception:
        pass
    vmem_budget = int(vmem_phys * 0.75)         # headroom for Mosaic scratch
    if tk_max is None:
        tk_max = 8192 if vmem_phys >= (96 << 20) else 4096

    x_b = jnp.dtype(x2.dtype).itemsize
    w_b = jnp.dtype(compute_dtype).itemsize
    o_b = out_dtype.itemsize

    # Single-buffer the stationary fc7 weight + biases when supported (frees
    # rep^2 bf16 bytes of VMEM — this is what lets larger row tiles fit on v7x).
    single_buf = hasattr(pl, "Buffered")
    w7_bufs = 1 if single_buf else 2

    # ---- tile selection ------------------------------------------------------
    tk, k_pad = _pick_tk(d_in, tk_max)

    def _vmem(tk_, tm_):
        fixed = (2 * tk_ * rep * w_b            # fc6 weight slab, double-buffered
                 + w7_bufs * rep * rep * w_b    # fc7 weight (stationary)
                 + 2 * w7_bufs * rep * 4)       # biases (f32)
        per_row = (2 * tk_ * x_b                # x slab, double-buffered
                   + rep * 4                    # f32 accumulator scratch
                   + 2 * rep * o_b)             # output tile, double-buffered
        return fixed, per_row, fixed + tm_ * per_row

    fixed, per_row, _ = _vmem(tk, 8)
    while fixed + 128 * per_row > vmem_budget and tk > 512:
        tk, k_pad = _pick_tk(d_in, tk // 2)     # shrink K slab until >=128 rows fit
        fixed, per_row, _ = _vmem(tk, 8)

    # Row tile: prefer tm = n_pad (a SINGLE row tile) so the dominant HBM tensor
    # (the fc6 weight, d_in*rep) is streamed exactly once instead of once per
    # row tile — the big win for this mem-bound head at typical ROI counts, and
    # it also keeps one v7x core owning the whole problem instead of both cores
    # re-streaming w6 against shared HBM.  Large-N (compute-bound) problems fall
    # back to multiple 128-aligned row tiles; that axis is "parallel" so v7x's
    # two TensorCores can shard it.
    n8 = _round_up(n, 8)
    tm_fit = max(8, (vmem_budget - fixed) // per_row)
    if n8 <= tm_fit:
        tm = n8
    elif tm_fit >= 128:
        tm = (tm_fit // 128) * 128
    else:
        tm = (tm_fit // 8) * 8
    n_pad = _round_up(n, tm)
    grid = (n_pad // tm, k_pad // tk)

    # ---- operand prep: NO dtype copies; only a tiny row pad of x -------------
    xw = x2
    if k_pad != d_in:                           # rare fallback (see _pick_tk)
        xw = jnp.pad(xw, ((0, 0), (0, k_pad - d_in)))
        w6 = jnp.pad(w6, ((0, k_pad - d_in), (0, 0)))
    if n_pad != n:
        xw = jnp.pad(xw, ((0, n_pad - n), (0, 0)))
    w6c = w6 if w6.dtype == compute_dtype else w6.astype(compute_dtype)
    w7c = w7 if w7.dtype == compute_dtype else w7.astype(compute_dtype)
    b6_2d = b6.reshape(1, rep).astype(jnp.float32)
    b7_2d = b7.reshape(1, rep).astype(jnp.float32)

    # ---- VMEM limit & cost hint ----------------------------------------------
    _, _, vmem_used = _vmem(tk, tm)
    vmem_limit = int(min(vmem_used * 1.3 + rep * rep * w_b + (2 << 20),
                         vmem_phys * 0.875))
    vmem_limit = max(vmem_limit, 8 << 20)

    cost = pl.CostEstimate(
        flops=2 * n_pad * (k_pad * rep + rep * rep),
        transcendentals=0,
        bytes_accessed=(n_pad * k_pad * x_b                  # x read once
                        + grid[0] * k_pad * rep * w_b        # w6 per row tile
                        + rep * rep * w_b + 2 * rep * 4      # w7 + biases
                        + n_pad * rep * o_b),                # output writeback
    )

    def _call(use_single_buffer):
        def _const_spec(shape):
            if use_single_buffer:
                return pl.BlockSpec(shape, lambda i, k: (0, 0),
                                    pipeline_mode=pl.Buffered(1))
            return pl.BlockSpec(shape, lambda i, k: (0, 0))

        return pl.pallas_call(
            _two_mlp_head_kernel,
            out_shape=jax.ShapeDtypeStruct((n_pad, rep), out_dtype),
            grid_spec=pltpu.PrefetchScalarGridSpec(
                num_scalar_prefetch=0,
                grid=grid,
                in_specs=[
                    pl.BlockSpec((tm, tk), lambda i, k: (i, k)),    # x rows / K slab
                    pl.BlockSpec((tk, rep), lambda i, k: (k, 0)),   # fc6 weight slab
                    _const_spec((1, rep)),                          # fc6 bias
                    _const_spec((rep, rep)),                        # fc7 weight
                    _const_spec((1, rep)),                          # fc7 bias
                ],
                out_specs=pl.BlockSpec((tm, rep), lambda i, k: (i, 0)),
                scratch_shapes=[pltpu.VMEM((tm, rep), jnp.float32)],
            ),
            compiler_params=pltpu.CompilerParams(
                dimension_semantics=("parallel", "arbitrary"),
                vmem_limit_bytes=int(vmem_limit),
            ),
            cost_estimate=cost,
        )(xw, w6c, b6_2d, w7c, b7_2d)

    if single_buf:
        try:
            out = _call(True)
        except Exception:          # pipeline_mode unsupported here -> default buffering
            out = _call(False)
    else:
        out = _call(False)

    return out[:n] if n_pad != n else out


def _reference(x, w6, b6, w7, b7):
    x2 = x.reshape(x.shape[0], -1)
    h = jnp.maximum(x2 @ w6 + b6, 0.0)
    return jnp.maximum(h @ w7 + b7, 0.0)


if __name__ == "__main__":
    # Small, TPU-friendly shapes consistent with the module:
    # ROI feature map (N, C, H, W) = (10, 4, 8, 8) -> in_channels = 256,
    # representation_size = 128.  N=10 deliberately exercises the ragged-row pad.
    N, C, H, W = 10, 4, 8, 8
    IN_CHANNELS = C * H * W          # 256
    REP = 128                        # representation_size

    key = jax.random.PRNGKey(0)
    kx, k6w, k6b, k7w, k7b = jax.random.split(key, 5)

    x = jax.random.normal(kx, (N, C, H, W), dtype=jnp.float32)
    # Deterministic synthetic parameters (no checkpoint load).
    w6 = jax.random.normal(k6w, (IN_CHANNELS, REP), dtype=jnp.float32) * 0.02
    b6 = jax.random.normal(k6b, (REP,), dtype=jnp.float32) * 0.01
    w7 = jax.random.normal(k7w, (REP, REP), dtype=jnp.float32) * 0.02
    b7 = jax.random.normal(k7b, (REP,), dtype=jnp.float32) * 0.01

    # Static weights: cast to bf16 ONCE, outside the per-call path.
    w6_c = w6.astype(jnp.bfloat16)
    w7_c = w7.astype(jnp.bfloat16)

    ref = _reference(x, w6, b6, w7, b7)

    # Default tiles: single row tile, single K step (w6 streamed exactly once).
    out = jax.block_until_ready(two_mlp_head(x, w6_c, b6, w7_c, b7))
    assert out.shape == (N, REP) and out.dtype == jnp.float32
    # bf16 MXU operands with f32 accumulation -> loosened tolerance vs f32 ref.
    assert jnp.allclose(out, ref, atol=2e-2, rtol=2e-2)

    # Force the K-tiled accumulator path (two reduction steps).
    out_kt = jax.block_until_ready(two_mlp_head(x, w6_c, b6, w7_c, b7, tk_max=128))
    assert out_kt.shape == (N, REP)
    assert jnp.allclose(out_kt, ref, atol=2e-2, rtol=2e-2)

    # bf16 output path (halves writeback) for downstream bf16 consumers.
    out_bf = jax.block_until_ready(
        two_mlp_head(x, w6_c, b6, w7_c, b7, out_dtype=jnp.bfloat16))
    assert out_bf.shape == (N, REP) and out_bf.dtype == jnp.bfloat16
    assert jnp.allclose(out_bf.astype(jnp.float32), ref, atol=5e-2, rtol=5e-2)

    # TODO(synk): optional int8 (v5e/v6e) / fp8 (v7x) weight path with per-channel
    # scales in the f32 epilogue is left out; bf16 weights are the portable default.
    print("KERNEL_OK")
</pallas_src>

<mosaic_0001>
module attributes {stable_mosaic.version = 11 : i64} {
  func.func @_two_mlp_head_kernel(%arg0: i32, %arg1: i32, %arg2: memref<16x256xf32, #tpu.memory_space<vmem>>, %arg3: memref<256x128xbf16, #tpu.memory_space<vmem>>, %arg4: memref<1x128xf32, #tpu.memory_space<vmem>>, %arg5: memref<128x128xbf16, #tpu.memory_space<vmem>>, %arg6: memref<1x128xf32, #tpu.memory_space<vmem>>, %arg7: memref<16x128xf32, #tpu.memory_space<vmem>>, %arg8: memref<16x128xf32, #tpu.memory_space<vmem>>) attributes {dimension_semantics = [#tpu.dimension_semantics<parallel>, #tpu.dimension_semantics<arbitrary>], iteration_bounds = array<i64: 1, 1>, scalar_prefetch = 0 : i64, scratch_operands = 1 : i64, tpu.core_type = #tpu.core_type<tc>, window_params = [{transform_indices = @transform_0, window_bounds = array<i64: 16, 256>}, {transform_indices = @transform_1, window_bounds = array<i64: 256, 128>}, {pipeline_mode = #tpu.pipeline_mode<synchronous>, transform_indices = @transform_2, window_bounds = array<i64: 1, 128>}, {pipeline_mode = #tpu.pipeline_mode<synchronous>, transform_indices = @transform_3, window_bounds = array<i64: 128, 128>}, {pipeline_mode = #tpu.pipeline_mode<synchronous>, transform_indices = @transform_4, window_bounds = array<i64: 1, 128>}, {transform_indices = @transform_5, window_bounds = array<i64: 16, 128>}]} {
    %c0_i32 = arith.constant 0 : i32
    %0 = arith.cmpi eq, %arg1, %c0_i32 : i32
    %1 = arith.extui %0 : i1 to i32
    %c0_i32_0 = arith.constant 0 : i32
    %2 = arith.cmpi ne, %1, %c0_i32_0 : i32
    scf.if %2 {
      %cst_10 = arith.constant 0.000000e+00 : f32
      %13 = vector.broadcast %cst_10 : f32 to vector<16x128xf32>
      %c0_11 = arith.constant 0 : index
      %c0_12 = arith.constant 0 : index
      %14 = vector.load %arg8[%c0_11, %c0_12] : memref<16x128xf32, #tpu.memory_space<vmem>>, vector<16x128xf32>
      tpu.vector_store %arg8[%c0_11, %c0_12], %13 {strides = array<i32>} : memref<16x128xf32, #tpu.memory_space<vmem>>, vector<16x128xf32>,
    } else {
    }
    %c0 = arith.constant 0 : index
    %c0_1 = arith.constant 0 : index
    %3 = vector.load %arg8[%c0, %c0_1] : memref<16x128xf32, #tpu.memory_space<vmem>>, vector<16x128xf32>
    %c0_2 = arith.constant 0 : index
    %c0_3 = arith.constant 0 : index
    %4 = vector.load %arg2[%c0_2, %c0_3] : memref<16x256xf32, #tpu.memory_space<vmem>>, vector<16x256xf32>
    %5 = arith.truncf %4 : vector<16x256xf32> to vector<16x256xbf16>
    %c0_4 = arith.constant 0 : index
    %c0_5 = arith.constant 0 : index
    %6 = vector.load %arg3[%c0_4, %c0_5] : memref<256x128xbf16, #tpu.memory_space<vmem>>, vector<256x128xbf16>
    %cst = arith.constant dense<0.000000e+00> : vector<16x128xf32>
    %7 = tpu.matmul %5, %6, %cst {dimension_numbers = #tpu.dot_dimension_numbers<[1], [0], [0], [1], [0, 0, 1, 1], [], []>} : vector<16x256xbf16>, vector<256x128xbf16>, vector<16x128xf32> -> vector<16x128xf32>
    %8 = arith.addf %3, %7 : vector<16x128xf32>
    %c0_6 = arith.constant 0 : index
    %c0_7 = arith.constant 0 : index
    %9 = vector.load %arg8[%c0_6, %c0_7] : memref<16x128xf32, #tpu.memory_space<vmem>>, vector<16x128xf32>
    tpu.vector_store %arg8[%c0_6, %c0_7], %8 {strides = array<i32>} : memref<16x128xf32, #tpu.memory_space<vmem>>, vector<16x128xf32>,
    %c0_i32_8 = arith.constant 0 : i32
    %10 = arith.cmpi eq, %arg1, %c0_i32_8 : i32
    %11 = arith.extui %10 : i1 to i32
    %c0_i32_9 = arith.constant 0 : i32
    %12 = arith.cmpi ne, %11, %c0_i32_9 : i32
    scf.if %12 {
      %c0_10 = arith.constant 0 : index
      %c0_11 = arith.constant 0 : index
      %13 = vector.load %arg8[%c0_10, %c0_11] : memref<16x128xf32, #tpu.memory_space<vmem>>, vector<16x128xf32>
      %c0_12 = arith.constant 0 : index
      %c0_13 = arith.constant 0 : index
      %14 = vector.load %arg4[%c0_12, %c0_13] : memref<1x128xf32, #tpu.memory_space<vmem>>, vector<1x128xf32>
      %15 = vector.broadcast %14 : vector<1x128xf32> to vector<16x128xf32>
      %16 = arith.addf %13, %15 : vector<16x128xf32>
      %cst_14 = arith.constant 0.000000e+00 : f32
      %17 = vector.broadcast %cst_14 : f32 to vector<16x128xf32>
      %18 = arith.maximumf %16, %17 : vector<16x128xf32>
      %19 = arith.truncf %18 : vector<16x128xf32> to vector<16x128xbf16>
      %c0_15 = arith.constant 0 : index
      %c0_16 = arith.constant 0 : index
      %20 = vector.load %arg5[%c0_15, %c0_16] : memref<128x128xbf16, #tpu.memory_space<vmem>>, vector<128x128xbf16>
      %cst_17 = arith.constant dense<0.000000e+00> : vector<16x128xf32>
      %21 = tpu.matmul %19, %20, %cst_17 {dimension_numbers = #tpu.dot_dimension_numbers<[1], [0], [0], [1], [0, 0, 1, 1], [], []>} : vector<16x128xbf16>, vector<128x128xbf16>, vector<16x128xf32> -> vector<16x128xf32>
      %c0_18 = arith.constant 0 : index
      %c0_19 = arith.constant 0 : index
      %22 = vector.load %arg6[%c0_18, %c0_19] : memref<1x128xf32, #tpu.memory_space<vmem>>, vector<1x128xf32>
      %23 = vector.broadcast %22 : vector<1x128xf32> to vector<16x128xf32>
      %24 = arith.addf %21, %23 : vector<16x128xf32>
      %cst_20 = arith.constant 0.000000e+00 : f32
      %25 = vector.broadcast %cst_20 : f32 to vector<16x128xf32>
      %26 = arith.maximumf %24, %25 : vector<16x128xf32>
      %c0_21 = arith.constant 0 : index
      %c0_22 = arith.constant 0 : index
      %27 = vector.load %arg7[%c0_21, %c0_22] : memref<16x128xf32, #tpu.memory_space<vmem>>, vector<16x128xf32>
      tpu.vector_store %arg7[%c0_21, %c0_22], %26 {strides = array<i32>} : memref<16x128xf32, #tpu.memory_space<vmem>>, vector<16x128xf32>,
    } else {
    }
    return
  }
  func.func @transform_0(%arg0: i32, %arg1: i32) -> (i32, i32) {
    %c0_i32 = arith.constant 0 : i32
    return %arg0, %arg1 : i32, i32
  }
  func.func @transform_1(%arg0: i32, %arg1: i32) -> (i32, i32) {
    %c0_i32 = arith.constant 0 : i32
    %c0_i32_0 = arith.constant 0 : i32
    return %arg1, %c0_i32 : i32, i32
  }
  func.func @transform_2(%arg0: i32, %arg1: i32) -> (i32, i32) {
    %c0_i32 = arith.constant 0 : i32
    %c0_i32_0 = arith.constant 0 : i32
    %c0_i32_1 = arith.constant 0 : i32
    return %c0_i32, %c0_i32_0 : i32, i32
  }
  func.func @transform_3(%arg0: i32, %arg1: i32) -> (i32, i32) {
    %c0_i32 = arith.constant 0 : i32
    %c0_i32_0 = arith.constant 0 : i32
    %c0_i32_1 = arith.constant 0 : i32
    return %c0_i32, %c0_i32_0 : i32, i32
  }
  func.func @transform_4(%arg0: i32, %arg1: i32) -> (i32, i32) {
    %c0_i32 = arith.constant 0 : i32
    %c0_i32_0 = arith.constant 0 : i32
    %c0_i32_1 = arith.constant 0 : i32
    return %c0_i32, %c0_i32_0 : i32, i32
  }
  func.func @transform_5(%arg0: i32, %arg1: i32) -> (i32, i32) {
    %c0_i32 = arith.constant 0 : i32
    %c0_i32_0 = arith.constant 0 : i32
    return %arg0, %c0_i32 : i32, i32
  }
}

module attributes {stable_mosaic.version = 11 : i64} {
  func.func @_two_mlp_head_kernel(%arg0: i32, %arg1: i32, %arg2: memref<16x256xf32, #tpu.memory_space<vmem>>, %arg3: memref<256x128xbf16, #tpu.memory_space<vmem>>, %arg4: memref<1x128xf32, #tpu.memory_space<vmem>>, %arg5: memref<128x128xbf16, #tpu.memory_space<vmem>>, %arg6: memref<1x128xf32, #tpu.memory_space<vmem>>, %arg7: memref<16x128xf32, #tpu.memory_space<vmem>>, %arg8: memref<16x128xf32, #tpu.memory_space<vmem>>) attributes {dimension_semantics = [#tpu.dimension_semantics<parallel>, #tpu.dimension_semantics<arbitrary>], iteration_bounds = array<i64: 1, 1>, scalar_prefetch = 0 : i64, scratch_operands = 1 : i64, tpu.core_type = #tpu.core_type<tc>, window_params = [{transform_indices = @transform_0, window_bounds = array<i64: 16, 256>}, {transform_indices = @transform_1, window_bounds = array<i64: 256, 128>}, {pipeline_mode = #tpu.pipeline_mode<synchronous>, transform_indices = @transform_2, window_bounds = array<i64: 1, 128>}, {pipeline_mode = #tpu.pipeline_mode<synchronous>, transform_indices = @transform_3, window_bounds = array<i64: 128, 128>}, {pipeline_mode = #tpu.pipeline_mode<synchronous>, transform_indices = @transform_4, window_bounds = array<i64: 1, 128>}, {transform_indices = @transform_5, window_bounds = array<i64: 16, 128>}]} {
    %c0_i32 = arith.constant 0 : i32
    %0 = arith.cmpi eq, %arg1, %c0_i32 : i32
    %1 = arith.extui %0 : i1 to i32
    %c0_i32_0 = arith.constant 0 : i32
    %2 = arith.cmpi ne, %1, %c0_i32_0 : i32
    scf.if %2 {
      %cst_10 = arith.constant 0.000000e+00 : f32
      %13 = vector.broadcast %cst_10 : f32 to vector<16x128xf32>
      %c0_11 = arith.constant 0 : index
      %c0_12 = arith.constant 0 : index
      %14 = vector.load %arg8[%c0_11, %c0_12] : memref<16x128xf32, #tpu.memory_space<vmem>>, vector<16x128xf32>
      tpu.vector_store %arg8[%c0_11, %c0_12], %13 {strides = array<i32>} : memref<16x128xf32, #tpu.memory_space<vmem>>, vector<16x128xf32>,
    } else {
    }
    %c0 = arith.constant 0 : index
    %c0_1 = arith.constant 0 : index
    %3 = vector.load %arg8[%c0, %c0_1] : memref<16x128xf32, #tpu.memory_space<vmem>>, vector<16x128xf32>
    %c0_2 = arith.constant 0 : index
    %c0_3 = arith.constant 0 : index
    %4 = vector.load %arg2[%c0_2, %c0_3] : memref<16x256xf32, #tpu.memory_space<vmem>>, vector<16x256xf32>
    %5 = arith.truncf %4 : vector<16x256xf32> to vector<16x256xbf16>
    %c0_4 = arith.constant 0 : index
    %c0_5 = arith.constant 0 : index
    %6 = vector.load %arg3[%c0_4, %c0_5] : memref<256x128xbf16, #tpu.memory_space<vmem>>, vector<256x128xbf16>
    %cst = arith.constant dense<0.000000e+00> : vector<16x128xf32>
    %7 = tpu.matmul %5, %6, %cst {dimension_numbers = #tpu.dot_dimension_numbers<[1], [0], [0], [1], [0, 0, 1, 1], [], []>} : vector<16x256xbf16>, vector<256x128xbf16>, vector<16x128xf32> -> vector<16x128xf32>
    %8 = arith.addf %3, %7 : vector<16x128xf32>
    %c0_6 = arith.constant 0 : index
    %c0_7 = arith.constant 0 : index
    %9 = vector.load %arg8[%c0_6, %c0_7] : memref<16x128xf32, #tpu.memory_space<vmem>>, vector<16x128xf32>
    tpu.vector_store %arg8[%c0_6, %c0_7], %8 {strides = array<i32>} : memref<16x128xf32, #tpu.memory_space<vmem>>, vector<16x128xf32>,
    %c0_i32_8 = arith.constant 0 : i32
    %10 = arith.cmpi eq, %arg1, %c0_i32_8 : i32
    %11 = arith.extui %10 : i1 to i32
    %c0_i32_9 = arith.constant 0 : i32
    %12 = arith.cmpi ne, %11, %c0_i32_9 : i32
    scf.if %12 {
      %c0_10 = arith.constant 0 : index
      %c0_11 = arith.constant 0 : index
      %13 = vector.load %arg8[%c0_10, %c0_11] : memref<16x128xf32, #tpu.memory_space<vmem>>, vector<16x128xf32>
      %c0_12 = arith.constant 0 : index
      %c0_13 = arith.constant 0 : index
      %14 = vector.load %arg4[%c0_12, %c0_13] : memref<1x128xf32, #tpu.memory_space<vmem>>, vector<1x128xf32>
      %15 = vector.broadcast %14 : vector<1x128xf32> to vector<16x128xf32>
      %16 = arith.addf %13, %15 : vector<16x128xf32>
      %cst_14 = arith.constant 0.000000e+00 : f32
      %17 = vector.broadcast %cst_14 : f32 to vector<16x128xf32>
      %18 = arith.maximumf %16, %17 : vector<16x128xf32>
      %19 = arith.truncf %18 : vector<16x128xf32> to vector<16x128xbf16>
      %c0_15 = arith.constant 0 : index
      %c0_16 = arith.constant 0 : index
      %20 = vector.load %arg5[%c0_15, %c0_16] : memref<128x128xbf16, #tpu.memory_space<vmem>>, vector<128x128xbf16>
      %cst_17 = arith.constant dense<0.000000e+00> : vector<16x128xf32>
      %21 = tpu.matmul %19, %20, %cst_17 {dimension_numbers = #tpu.dot_dimension_numbers<[1], [0], [0], [1], [0, 0, 1, 1], [], []>} : vector<16x128xbf16>, vector<128x128xbf16>, vector<16x128xf32> -> vector<16x128xf32>
      %c0_18 = arith.constant 0 : index
      %c0_19 = arith.constant 0 : index
      %22 = vector.load %arg6[%c0_18, %c0_19] : memref<1x128xf32, #tpu.memory_space<vmem>>, vector<1x128xf32>
      %23 = vector.broadcast %22 : vector<1x128xf32> to vector<16x128xf32>
      %24 = arith.addf %21, %23 : vector<16x128xf32>
      %cst_20 = arith.constant 0.000000e+00 : f32
      %25 = vector.broadcast %cst_20 : f32 to vector<16x128xf32>
      %26 = arith.maximumf %24, %25 : vector<16x128xf32>
      %c0_21 = arith.constant 0 : index
      %c0_22 = arith.constant 0 : index
      %27 = vector.load %arg7[%c0_21, %c0_22] : memref<16x128xf32, #tpu.memory_space<vmem>>, vector<16x128xf32>
      tpu.vector_store %arg7[%c0_21, %c0_22], %26 {strides = array<i32>} : memref<16x128xf32, #tpu.memory_space<vmem>>, vector<16x128xf32>,
    } else {
    }
    return
  }
  func.func @transform_0(%arg0: i32, %arg1: i32) -> (i32, i32) {
    %c0_i32 = arith.constant 0 : i32
    return %arg0, %arg1 : i32, i32
  }
  func.func @transform_1(%arg0: i32, %arg1: i32) -> (i32, i32) {
    %c0_i32 = arith.constant 0 : i32
    %c0_i32_0 = arith.constant 0 : i32
    return %arg1, %c0_i32 : i32, i32
  }
  func.func @transform_2(%arg0: i32, %arg1: i32) -> (i32, i32) {
    %c0_i32 = arith.constant 0 : i32
    %c0_i32_0 = arith.constant 0 : i32
    %c0_i32_1 = arith.constant 0 : i32
    return %c0_i32, %c0_i32_0 : i32, i32
  }
  func.func @transform_3(%arg0: i32, %arg1: i32) -> (i32, i32) {
    %c0_i32 = arith.constant 0 : i32
    %c0_i32_0 = arith.constant 0 : i32
    %c0_i32_1 = arith.constant 0 : i32
    return %c0_i32, %c0_i32_0 : i32, i32
  }
  func.func @transform_4(%arg0: i32, %arg1: i32) -> (i32, i32) {
    %c0_i32 = arith.constant 0 : i32
    %c0_i32_0 = arith.constant 0 : i32
    %c0_i32_1 = arith.constant 0 : i32
    return %c0_i32, %c0_i32_0 : i32, i32
  }
  func.func @transform_5(%arg0: i32, %arg1: i32) -> (i32, i32) {
    %c0_i32 = arith.constant 0 : i32
    %c0_i32_0 = arith.constant 0 : i32
    return %arg0, %c0_i32 : i32, i32
  }
}

</mosaic_0001>

<llo_original>
// kernel: tpu_custom_call.1
$region0: #{tpu_custom_call.1}
  #allocation0 [shape = 'u32[]', space=smem, size = 0x4, offset = 0x4, fixed_abs, tag = 'smem constant byte address 0x4 - core index']
  #allocation1 [shape = 'u32[72,128]{1,0:T(1,128)}', space=vmem, size = 0x9000, scoped, tag = 'internal scratch']
  #allocation2 [shape = 'f32[16,128]{1,0:T(8,128)}', space=vmem, size = 0x2000, scoped, tag = 'scratch operand']
  %s0 = inlined_call_operand.hbm [shape: f32[16,256], index: 0, kind: input, shape index: {}]
  %s1 = inlined_call_operand.hbm [shape: bf16[256,128], index: 1, kind: input, shape index: {}]
  %s2 = inlined_call_operand.vmem [shape: f32[1,128], index: 2, kind: input, shape index: {}]
  %s3 = inlined_call_operand.hbm [shape: bf16[128,128], index: 3, kind: input, shape index: {}]
  %s4 = inlined_call_operand.vmem [shape: f32[1,128], index: 4, kind: input, shape index: {}]
  %s5 = inlined_call_operand.hbm [shape: f32[16,128], index: 5, kind: output, shape index: {}]
  %s6 = sld [smem:[#allocation0]]
  $region50: #{tpu_custom_call.1} parent=0
    _
  %s8 = ssub.s32 1, %s6
  %s9 = scalar_select 0, %s8, %s6
  $region1: #{tpu_custom_call.1} parent=0
    #allocation3 [shape = 'u8[16384]{0}', space=vmem, size = 0x4000, scoped, tag = 'input window, operand 0, single buffered']
    #allocation4 [shape = 's32[1]{0}', space=sflag, size = 0x4, scoped, tag = 'scoped memory for tpu_custom_call.1']
    #allocation5 [shape = 's32[1]{0}', space=sflag, size = 0x4, scoped, tag = 'scoped memory for tpu_custom_call.1']
    #allocation6 [shape = 'u8[65536]{0}', space=vmem, size = 0x10000, scoped, tag = 'input window, operand 1, single buffered']
    #allocation7 [shape = 's32[1]{0}', space=sflag, size = 0x4, scoped, tag = 'scoped memory for tpu_custom_call.1']
    #allocation8 [shape = 'u8[32768]{0}', space=vmem, size = 0x8000, scoped, tag = 'input window, operand 3, single buffered']
    #allocation9 [shape = 'u8[8192]{0}', space=vmem, size = 0x2000, scoped, tag = 'output window, operand 0, single buffered']
    %10 = vsyncpa [#allocation4], 0
    %11 = vsyncpa [#allocation7], 0
    %12 = vsyncpa [#allocation5], 0
    // Predicated region
    $region2: #{tpu_custom_call.1} parent=1 // pred_check
      _
    $region3: #{tpu_custom_call.1} parent=1 // pred_check_branch
      %14 = sbr.rel (0) target = $region5
    $region4: #{tpu_custom_call.1} parent=1 // pred_region
      %16 = vsyncadd [#allocation4], 0
      %s17 = sshll.u32 %s0, 4
      %s18 = int_to_ptr.hbm [resolvable:$true] %s17
      %s19 = sshll.u32 [#allocation3], 4
      %s20 = int_to_ptr.vmem [resolvable:$true] %s19
      %25 = dma.hbm_to_vmem [thread:$0]  %s18, 512, %s20, [#allocation4], 256, 256, 16
    $region5: #{tpu_custom_call.1} parent=1 // pred_fallthru
      _
    // Predicated region
    $region6: #{tpu_custom_call.1} parent=1 // pred_check
      _
    $region7: #{tpu_custom_call.1} parent=1 // pred_check_branch
      %27 = sbr.rel (0) target = $region9
    $region8: #{tpu_custom_call.1} parent=1 // pred_region
      %29 = vsyncadd [#allocation7], 0
      %s30 = sshll.u32 %s1, 4
      %s31 = int_to_ptr.hbm [resolvable:$true] %s30
      %s32 = sshll.u32 [#allocation6], 4
      %s33 = int_to_ptr.vmem [resolvable:$true] %s32
      %38 = dma.hbm_to_vmem [thread:$0]  %s31, 2048, %s33, [#allocation7], 64, 64, 4
    $region9: #{tpu_custom_call.1} parent=1 // pred_fallthru
      _
    // Predicated region
    $region10: #{tpu_custom_call.1} parent=1 // pred_check
      _
    $region11: #{tpu_custom_call.1} parent=1 // pred_check_branch
      %40 = sbr.rel (0) target = $region13
    $region12: #{tpu_custom_call.1} parent=1 // pred_region
      _
    $region13: #{tpu_custom_call.1} parent=1 // pred_fallthru
      _
    // Predicated region
    $region14: #{tpu_custom_call.1} parent=1 // pred_check
      _
    $region15: #{tpu_custom_call.1} parent=1 // pred_check_branch
      %42 = sbr.rel (0) target = $region17
    $region16: #{tpu_custom_call.1} parent=1 // pred_region
      %44 = vsyncadd [#allocation7], 0
      %s45 = sshll.u32 %s3, 4
      %s46 = int_to_ptr.hbm [resolvable:$true] %s45
      %s47 = sshll.u32 [#allocation8], 4
      %s48 = int_to_ptr.vmem [resolvable:$true] %s47
      %53 = dma.hbm_to_vmem [thread:$0]  %s46, 1024, %s48, [#allocation7], 64, 64, 4
    $region17: #{tpu_custom_call.1} parent=1 // pred_fallthru
      _
    // Predicated region
    $region18: #{tpu_custom_call.1} parent=1 // pred_check
      _
    $region19: #{tpu_custom_call.1} parent=1 // pred_check_branch
      %55 = sbr.rel (0) target = $region21
    $region20: #{tpu_custom_call.1} parent=1 // pred_region
      _
    $region21: #{tpu_custom_call.1} parent=1 // pred_fallthru
      _
    // Predicated region
    $region22: #{tpu_custom_call.1} parent=1 // pred_check
      _
    $region23: #{tpu_custom_call.1} parent=1 // pred_check_branch
      %57 = sbr.rel (0) target = $region25
    $region24: #{tpu_custom_call.1} parent=1 // pred_region
      %59 = dma.done [#allocation4], 512
    $region25: #{tpu_custom_call.1} parent=1 // pred_fallthru
      _
    // Predicated region
    $region26: #{tpu_custom_call.1} parent=1 // pred_check
      _
    $region27: #{tpu_custom_call.1} parent=1 // pred_check_branch
      %61 = sbr.rel (0) target = $region29
    $region28: #{tpu_custom_call.1} parent=1 // pred_region
      %63 = dma.done [#allocation7], 2048
    $region29: #{tpu_custom_call.1} parent=1 // pred_fallthru
      _
    // Predicated region
    $region30: #{tpu_custom_call.1} parent=1 // pred_check
      _
    $region31: #{tpu_custom_call.1} parent=1 // pred_check_branch
      %65 = sbr.rel (0) target = $region33
    $region32: #{tpu_custom_call.1} parent=1 // pred_region
      %67 = dma.done [#allocation7], 1024
    $region33: #{tpu_custom_call.1} parent=1 // pred_fallthru
      _
    %p68 = scmp.eq.s32.totalorder 0, 0
    // Predicated region
    $region34: #{tpu_custom_call.1} parent=1 // pred_check
      %p69 = pneg %p68
    $region35: #{tpu_custom_call.1} parent=1 // pred_check_branch
      %71 = sbr.rel (%p69) target = $region37
    $region36: #{tpu_custom_call.1} parent=1 // pred_region
      %72 = vst [vmem:[#allocation2] sm:$0xff] 0.0
      %73 = vst [vmem:[#allocation2 + $0x8] sm:$0xff] 0.0
    $region37: #{tpu_custom_call.1} parent=1 // pred_fallthru
      _
    %v74 = vld [vmem:[#allocation2] sm:$0xff]
    %v75 = vld [vmem:[#allocation2 + $0x8] sm:$0xff]
    %v76 = vld [vmem:[#allocation3] sm:$0xff]
    %v77 = vld [vmem:[#allocation3 + $0x8] sm:$0xff]
    %v78 = vld [vmem:[#allocation3 + $0x10] sm:$0xff]
    %v79 = vld [vmem:[#allocation3 + $0x18] sm:$0xff]
    %v80 = vpack.c.bf16 %v78, %v76
    %v81 = vpack.c.bf16 %v79, %v77
    %v82 = vld [vmem:[#allocation6] sm:$0xf]
    %v83 = vld [vmem:[#allocation6 + $0x4] sm:$0xf]
    %v84 = vld [vmem:[#allocation6 + $0x8] sm:$0xf]
    %v85 = vld [vmem:[#allocation6 + $0xc] sm:$0xf]
    %v86 = vld [vmem:[#allocation6 + $0x10] sm:$0xf]
    %v87 = vld [vmem:[#allocation6 + $0x14] sm:$0xf]
    %v88 = vld [vmem:[#allocation6 + $0x18] sm:$0xf]
    %v89 = vld [vmem:[#allocation6 + $0x1c] sm:$0xf]
    %v90 = vld [vmem:[#allocation6 + $0x20] sm:$0xf]
    %v91 = vld [vmem:[#allocation6 + $0x24] sm:$0xf]
    %v92 = vld [vmem:[#allocation6 + $0x28] sm:$0xf]
    %v93 = vld [vmem:[#allocation6 + $0x2c] sm:$0xf]
    %v94 = vld [vmem:[#allocation6 + $0x30] sm:$0xf]
    %v95 = vld [vmem:[#allocation6 + $0x34] sm:$0xf]
    %v96 = vld [vmem:[#allocation6 + $0x38] sm:$0xf]
    %v97 = vld [vmem:[#allocation6 + $0x3c] sm:$0xf]
    %v98 = vld [vmem:[#allocation6 + $0x40] sm:$0xf]
    %v99 = vld [vmem:[#allocation6 + $0x44] sm:$0xf]
    %v100 = vld [vmem:[#allocation6 + $0x48] sm:$0xf]
    %v101 = vld [vmem:[#allocation6 + $0x4c] sm:$0xf]
    %v102 = vld [vmem:[#allocation6 + $0x50] sm:$0xf]
    %v103 = vld [vmem:[#allocation6 + $0x54] sm:$0xf]
    %v104 = vld [vmem:[#allocation6 + $0x58] sm:$0xf]
    %v105 = vld [vmem:[#allocation6 + $0x5c] sm:$0xf]
    %v106 = vld [vmem:[#allocation6 + $0x60] sm:$0xf]
    %v107 = vld [vmem:[#allocation6 + $0x64] sm:$0xf]
    %v108 = vld [vmem:[#allocation6 + $0x68] sm:$0xf]
    %v109 = vld [vmem:[#allocation6 + $0x6c] sm:$0xf]
    %v110 = vld [vmem:[#allocation6 + $0x70] sm:$0xf]
    %v111 = vld [vmem:[#allocation6 + $0x74] sm:$0xf]
    %v112 = vld [vmem:[#allocation6 + $0x78] sm:$0xf]
    %v113 = vld [vmem:[#allocation6 + $0x7c] sm:$0xf]
    %v146 = vunpack.c.l.b16 %v82
    %v147 = vunpack.c.l.b16 %v83
    %v148 = vunpack.c.l.b16 %v84
    %v149 = vunpack.c.l.b16 %v85
    %v150 = vunpack.c.l.b16 %v86
    %v151 = vunpack.c.l.b16 %v87
    %v152 = vunpack.c.l.b16 %v88
    %v153 = vunpack.c.l.b16 %v89
    %v154 = vunpack.c.l.b16 %v90
    %v155 = vunpack.c.l.b16 %v91
    %v156 = vunpack.c.l.b16 %v92
    %v157 = vunpack.c.l.b16 %v93
    %v158 = vunpack.c.l.b16 %v94
    %v159 = vunpack.c.l.b16 %v95
    %v160 = vunpack.c.l.b16 %v96
    %v161 = vunpack.c.l.b16 %v97
    %v162 = vunpack.c.l.b16 %v98
    %v163 = vunpack.c.l.b16 %v99
    %v164 = vunpack.c.l.b16 %v100
    %v165 = vunpack.c.l.b16 %v101
    %v166 = vunpack.c.l.b16 %v102
    %v167 = vunpack.c.l.b16 %v103
    %v168 = vunpack.c.l.b16 %v104
    %v169 = vunpack.c.l.b16 %v105
    %v170 = vunpack.c.l.b16 %v106
    %v171 = vunpack.c.l.b16 %v107
    %v172 = vunpack.c.l.b16 %v108
    %v173 = vunpack.c.l.b16 %v109
    %v174 = vunpack.c.l.b16 %v110
    %v175 = vunpack.c.l.b16 %v111
    %v176 = vunpack.c.l.b16 %v112
    %v177 = vunpack.c.l.b16 %v113
    %v178 = vpack.c.b16 %v147, %v146
    %v179 = vpack.c.b16 %v149, %v148
    %v180 = vpack.c.b16 %v151, %v150
    %v181 = vpack.c.b16 %v153, %v152
    %v182 = vpack.c.b16 %v155, %v154
    %v183 = vpack.c.b16 %v157, %v156
    %v184 = vpack.c.b16 %v159, %v158
    %v185 = vpack.c.b16 %v161, %v160
    %v186 = vpack.c.b16 %v163, %v162
    %v187 = vpack.c.b16 %v165, %v164
    %v188 = vpack.c.b16 %v167, %v166
    %v189 = vpack.c.b16 %v169, %v168
    %v190 = vpack.c.b16 %v171, %v170
    %v191 = vpack.c.b16 %v173, %v172
    %v192 = vpack.c.b16 %v175, %v174
    %v193 = vpack.c.b16 %v177, %v176
    %210 = vmatpush.bf16.msra.mxu0 %v185
    %211 = vmatpush.bf16.msra.mxu0 %v184
    %212 = vmatpush.bf16.msra.mxu0 %v183
    %213 = vmatpush.bf16.msra.mxu0 %v182
    %214 = vmatpush.bf16.msra.mxu0 %v181
    %215 = vmatpush.bf16.msra.mxu0 %v180
    %216 = vmatpush.bf16.msra.mxu0 %v179
    %217 = vmatpush.bf16.msra.mxu0 %v178
    %218 = vmatmul.bf16.gmra.mxu0 %v80
    %v219 = vpop.f32.mrf.mxu0
    %v220 = vadd.f32 0.0, %v219
    %v221 = vpop.f32.mrf.mxu0
    %v222 = vadd.f32 0.0, %v221
    %223 = vdwg.mxu0
    %224 = vmatpush.bf16.msra.mxu0 %v193
    %225 = vmatpush.bf16.msra.mxu0 %v192
    %226 = vmatpush.bf16.msra.mxu0 %v191
    %227 = vmatpush.bf16.msra.mxu0 %v190
    %228 = vmatpush.bf16.msra.mxu0 %v189
    %229 = vmatpush.bf16.msra.mxu0 %v188
    %230 = vmatpush.bf16.msra.mxu0 %v187
    %231 = vmatpush.bf16.msra.mxu0 %v186
    %232 = vmatmul.bf16.gmra.mxu0 %v81
    %v233 = vpop.f32.mrf.mxu0
    %v234 = vadd.f32 %v220, %v233
    %v235 = vpop.f32.mrf.mxu0
    %v236 = vadd.f32 %v222, %v235
    %237 = vdwg.mxu0
    %v238 = vadd.f32 %v74, %v234
    %v239 = vadd.f32 %v75, %v236
    %240 = vst [vmem:[#allocation2] sm:$0xff] %v238
    %241 = vst [vmem:[#allocation2 + $0x8] sm:$0xff] %v239
    // Predicated region
    $region38: #{tpu_custom_call.1} parent=1 // pred_check
      %p242 = pneg %p68
    $region39: #{tpu_custom_call.1} parent=1 // pred_check_branch
      %244 = sbr.rel (%p242) target = $region41
    $region40: #{tpu_custom_call.1} parent=1 // pred_region
      %v245 = vld [vmem:[#allocation2] sm:$0xff]
      %v246 = vld [vmem:[#allocation2 + $0x8] sm:$0xff]
      %v247 = vld [vmem:[%s2] sm:$0x1]
      %v249 = vperm.slane %v247, 0
      %v251 = vadd.f32 %v245, %v249
      %v252 = vadd.f32 %v246, %v249
      %v253 = vmax.f32 %v251, 0.0
      %v254 = vmax.f32 %v252, 0.0
      %v255 = vpack.c.bf16 %v254, %v253
      %v256 = vld [vmem:[#allocation8] sm:$0xf]
      %v257 = vld [vmem:[#allocation8 + $0x4] sm:$0xf]
      %v258 = vld [vmem:[#allocation8 + $0x8] sm:$0xf]
      %v259 = vld [vmem:[#allocation8 + $0xc] sm:$0xf]
      %v260 = vld [vmem:[#allocation8 + $0x10] sm:$0xf]
      %v261 = vld [vmem:[#allocation8 + $0x14] sm:$0xf]
      %v262 = vld [vmem:[#allocation8 + $0x18] sm:$0xf]
      %v263 = vld [vmem:[#allocation8 + $0x1c] sm:$0xf]
      %v264 = vld [vmem:[#allocation8 + $0x20] sm:$0xf]
      %v265 = vld [vmem:[#allocation8 + $0x24] sm:$0xf]
      %v266 = vld [vmem:[#allocation8 + $0x28] sm:$0xf]
      %v267 = vld [vmem:[#allocation8 + $0x2c] sm:$0xf]
      %v268 = vld [vmem:[#allocation8 + $0x30] sm:$0xf]
      %v269 = vld [vmem:[#allocation8 + $0x34] sm:$0xf]
      %v270 = vld [vmem:[#allocation8 + $0x38] sm:$0xf]
      %v271 = vld [vmem:[#allocation8 + $0x3c] sm:$0xf]
      %v272 = vld [vmem:[%s4] sm:$0x1]
      %v274 = vperm.slane %v272, 0
      %v292 = vunpack.c.l.b16 %v256
      %v293 = vunpack.c.l.b16 %v257
      %v294 = vunpack.c.l.b16 %v258
      %v295 = vunpack.c.l.b16 %v259
      %v296 = vunpack.c.l.b16 %v260
      %v297 = vunpack.c.l.b16 %v261
      %v298 = vunpack.c.l.b16 %v262
      %v299 = vunpack.c.l.b16 %v263
      %v300 = vunpack.c.l.b16 %v264
      %v301 = vunpack.c.l.b16 %v265
      %v302 = vunpack.c.l.b16 %v266
      %v303 = vunpack.c.l.b16 %v267
      %v304 = vunpack.c.l.b16 %v268
      %v305 = vunpack.c.l.b16 %v269
      %v306 = vunpack.c.l.b16 %v270
      %v307 = vunpack.c.l.b16 %v271
      %v308 = vpack.c.b16 %v293, %v292
      %v309 = vpack.c.b16 %v295, %v294
      %v310 = vpack.c.b16 %v297, %v296
      %v311 = vpack.c.b16 %v299, %v298
      %v312 = vpack.c.b16 %v301, %v300
      %v313 = vpack.c.b16 %v303, %v302
      %v314 = vpack.c.b16 %v305, %v304
      %v315 = vpack.c.b16 %v307, %v306
      %324 = vmatpush.bf16.msra.mxu0 %v315
      %325 = vmatpush.bf16.msra.mxu0 %v314
      %326 = vmatpush.bf16.msra.mxu0 %v313
      %327 = vmatpush.bf16.msra.mxu0 %v312
      %328 = vmatpush.bf16.msra.mxu0 %v311
      %329 = vmatpush.bf16.msra.mxu0 %v310
      %330 = vmatpush.bf16.msra.mxu0 %v309
      %331 = vmatpush.bf16.msra.mxu0 %v308
      %332 = vmatmul.bf16.gmra.mxu0 %v255
      %v333 = vpop.f32.mrf.mxu0
      %v334 = vadd.f32 %v274, %v333
      %v335 = vpop.f32.mrf.mxu0
      %v336 = vadd.f32 %v274, %v335
      %337 = vdwg.mxu0
      %v338 = vmax.f32 %v334, 0.0
      %v339 = vmax.f32 %v336, 0.0
      %340 = vst [vmem:[#allocation9] sm:$0xff] %v338
      %341 = vst [vmem:[#allocation9 + $0x8] sm:$0xff] %v339
    $region41: #{tpu_custom_call.1} parent=1 // pred_fallthru
      _
    // Predicated region
    $region42: #{tpu_custom_call.1} parent=1 // pred_check
      _
    $region43: #{tpu_custom_call.1} parent=1 // pred_check_branch
      %343 = sbr.rel (0) target = $region45
    $region44: #{tpu_custom_call.1} parent=1 // pred_region
      %345 = vsyncadd [#allocation5], 0
      %s346 = sshll.u32 [#allocation9], 4
      %s347 = int_to_ptr.vmem [resolvable:$true] %s346
      %s348 = sshll.u32 %s5, 4
      %s349 = int_to_ptr.hbm [resolvable:$true] %s348
      %354 = dma.vmem_to_hbm [thread:$0]  %s347, 256, %s349, [#allocation5], 128, 128, 8
    $region45: #{tpu_custom_call.1} parent=1 // pred_fallthru
      _
    // Predicated region
    $region46: #{tpu_custom_call.1} parent=1 // pred_check
      _
    $region47: #{tpu_custom_call.1} parent=1 // pred_check_branch
      %356 = sbr.rel (0) target = $region49
    $region48: #{tpu_custom_call.1} parent=1 // pred_region
      %358 = dma.done [#allocation5], 256
    $region49: #{tpu_custom_call.1} parent=1 // pred_fallthru
      _
    %359 = vsyncpa [#allocation4], 1
    %360 = vsyncpa [#allocation7], 1
    %361 = vsyncpa [#allocation5], 1

// kernel: tpu_custom_call.1
$region0: #{tpu_custom_call.1}
  #allocation0 [shape = 'u32[]', space=smem, size = 0x4, offset = 0x4, fixed_abs, tag = 'smem constant byte address 0x4 - core index']
  #allocation1 [shape = 'u32[72,128]{1,0:T(1,128)}', space=vmem, size = 0x9000, scoped, tag = 'internal scratch']
  #allocation2 [shape = 'f32[16,128]{1,0:T(8,128)}', space=vmem, size = 0x2000, scoped, tag = 'scratch operand']
  %s0 = inlined_call_operand.hbm [shape: f32[16,256], index: 0, kind: input, shape index: {}]
  %s1 = inlined_call_operand.hbm [shape: bf16[256,128], index: 1, kind: input, shape index: {}]
  %s2 = inlined_call_operand.vmem [shape: f32[1,128], index: 2, kind: input, shape index: {}]
  %s3 = inlined_call_operand.hbm [shape: bf16[128,128], index: 3, kind: input, shape index: {}]
  %s4 = inlined_call_operand.vmem [shape: f32[1,128], index: 4, kind: input, shape index: {}]
  %s5 = inlined_call_operand.hbm [shape: f32[16,128], index: 5, kind: output, shape index: {}]
  %s6 = sld [smem:[#allocation0]]
  $region50: #{tpu_custom_call.1} parent=0
    _
  %s8 = ssub.s32 1, %s6
  %s9 = scalar_select 0, %s8, %s6
  $region1: #{tpu_custom_call.1} parent=0
    #allocation3 [shape = 'u8[16384]{0}', space=vmem, size = 0x4000, scoped, tag = 'input window, operand 0, single buffered']
    #allocation4 [shape = 's32[1]{0}', space=sflag, size = 0x4, scoped, tag = 'scoped memory for tpu_custom_call.1']
    #allocation5 [shape = 's32[1]{0}', space=sflag, size = 0x4, scoped, tag = 'scoped memory for tpu_custom_call.1']
    #allocation6 [shape = 'u8[65536]{0}', space=vmem, size = 0x10000, scoped, tag = 'input window, operand 1, single buffered']
    #allocation7 [shape = 's32[1]{0}', space=sflag, size = 0x4, scoped, tag = 'scoped memory for tpu_custom_call.1']
    #allocation8 [shape = 'u8[32768]{0}', space=vmem, size = 0x8000, scoped, tag = 'input window, operand 3, single buffered']
    #allocation9 [shape = 'u8[8192]{0}', space=vmem, size = 0x2000, scoped, tag = 'output window, operand 0, single buffered']
    %10 = vsyncpa [#allocation4], 0
    %11 = vsyncpa [#allocation7], 0
    %12 = vsyncpa [#allocation5], 0
    // Predicated region
    $region2: #{tpu_custom_call.1} parent=1 // pred_check
      _
    $region3: #{tpu_custom_call.1} parent=1 // pred_check_branch
      %14 = sbr.rel (0) target = $region5
    $region4: #{tpu_custom_call.1} parent=1 // pred_region
      %16 = vsyncadd [#allocation4], 0
      %s17 = sshll.u32 %s0, 4
      %s18 = int_to_ptr.hbm [resolvable:$true] %s17
      %s19 = sshll.u32 [#allocation3], 4
      %s20 = int_to_ptr.vmem [resolvable:$true] %s19
      %25 = dma.hbm_to_vmem [thread:$0]  %s18, 512, %s20, [#allocation4], 256, 256, 16
    $region5: #{tpu_custom_call.1} parent=1 // pred_fallthru
      _
    // Predicated region
    $region6: #{tpu_custom_call.1} parent=1 // pred_check
      _
    $region7: #{tpu_custom_call.1} parent=1 // pred_check_branch
      %27 = sbr.rel (0) target = $region9
    $region8: #{tpu_custom_call.1} parent=1 // pred_region
      %29 = vsyncadd [#allocation7], 0
      %s30 = sshll.u32 %s1, 4
      %s31 = int_to_ptr.hbm [resolvable:$true] %s30
      %s32 = sshll.u32 [#allocation6], 4
      %s33 = int_to_ptr.vmem [resolvable:$true] %s32
      %38 = dma.hbm_to_vmem [thread:$0]  %s31, 2048, %s33, [#allocation7], 64, 64, 4
    $region9: #{tpu_custom_call.1} parent=1 // pred_fallthru
      _
    // Predicated region
    $region10: #{tpu_custom_call.1} parent=1 // pred_check
      _
    $region11: #{tpu_custom_call.1} parent=1 // pred_check_branch
      %40 = sbr.rel (0) target = $region13
    $region12: #{tpu_custom_call.1} parent=1 // pred_region
      _
    $region13: #{tpu_custom_call.1} parent=1 // pred_fallthru
      _
    // Predicated region
    $region14: #{tpu_custom_call.1} parent=1 // pred_check
      _
    $region15: #{tpu_custom_call.1} parent=1 // pred_check_branch
      %42 = sbr.rel (0) target = $region17
    $region16: #{tpu_custom_call.1} parent=1 // pred_region
      %44 = vsyncadd [#allocation7], 0
      %s45 = sshll.u32 %s3, 4
      %s46 = int_to_ptr.hbm [resolvable:$true] %s45
      %s47 = sshll.u32 [#allocation8], 4
      %s48 = int_to_ptr.vmem [resolvable:$true] %s47
      %53 = dma.hbm_to_vmem [thread:$0]  %s46, 1024, %s48, [#allocation7], 64, 64, 4
    $region17: #{tpu_custom_call.1} parent=1 // pred_fallthru
      _
    // Predicated region
    $region18: #{tpu_custom_call.1} parent=1 // pred_check
      _
    $region19: #{tpu_custom_call.1} parent=1 // pred_check_branch
      %55 = sbr.rel (0) target = $region21
    $region20: #{tpu_custom_call.1} parent=1 // pred_region
      _
    $region21: #{tpu_custom_call.1} parent=1 // pred_fallthru
      _
    // Predicated region
    $region22: #{tpu_custom_call.1} parent=1 // pred_check
      _
    $region23: #{tpu_custom_call.1} parent=1 // pred_check_branch
      %57 = sbr.rel (0) target = $region25
    $region24: #{tpu_custom_call.1} parent=1 // pred_region
      %59 = dma.done [#allocation4], 512
    $region25: #{tpu_custom_call.1} parent=1 // pred_fallthru
      _
    // Predicated region
    $region26: #{tpu_custom_call.1} parent=1 // pred_check
      _
    $region27: #{tpu_custom_call.1} parent=1 // pred_check_branch
      %61 = sbr.rel (0) target = $region29
    $region28: #{tpu_custom_call.1} parent=1 // pred_region
      %63 = dma.done [#allocation7], 2048
    $region29: #{tpu_custom_call.1} parent=1 // pred_fallthru
      _
    // Predicated region
    $region30: #{tpu_custom_call.1} parent=1 // pred_check
      _
    $region31: #{tpu_custom_call.1} parent=1 // pred_check_branch
      %65 = sbr.rel (0) target = $region33
    $region32: #{tpu_custom_call.1} parent=1 // pred_region
      %67 = dma.done [#allocation7], 1024
    $region33: #{tpu_custom_call.1} parent=1 // pred_fallthru
      _
    %p68 = scmp.eq.s32.totalorder 0, 0
    // Predicated region
    $region34: #{tpu_custom_call.1} parent=1 // pred_check
      %p69 = pneg %p68
    $region35: #{tpu_custom_call.1} parent=1 // pred_check_branch
      %71 = sbr.rel (%p69) target = $region37
    $region36: #{tpu_custom_call.1} parent=1 // pred_region
      %72 = vst [vmem:[#allocation2] sm:$0xff] 0.0
      %73 = vst [vmem:[#allocation2 + $0x8] sm:$0xff] 0.0
    $region37: #{tpu_custom_call.1} parent=1 // pred_fallthru
      _
    %v74 = vld [vmem:[#allocation2] sm:$0xff]
    %v75 = vld [vmem:[#allocation2 + $0x8] sm:$0xff]
    %v76 = vld [vmem:[#allocation3] sm:$0xff]
    %v77 = vld [vmem:[#allocation3 + $0x8] sm:$0xff]
    %v78 = vld [vmem:[#allocation3 + $0x10] sm:$0xff]
    %v79 = vld [vmem:[#allocation3 + $0x18] sm:$0xff]
    %v80 = vpack.c.bf16 %v78, %v76
    %v81 = vpack.c.bf16 %v79, %v77
    %v82 = vld [vmem:[#allocation6] sm:$0xf]
    %v83 = vld [vmem:[#allocation6 + $0x4] sm:$0xf]
    %v84 = vld [vmem:[#allocation6 + $0x8] sm:$0xf]
    %v85 = vld [vmem:[#allocation6 + $0xc] sm:$0xf]
    %v86 = vld [vmem:[#allocation6 + $0x10] sm:$0xf]
    %v87 = vld [vmem:[#allocation6 + $0x14] sm:$0xf]
    %v88 = vld [vmem:[#allocation6 + $0x18] sm:$0xf]
    %v89 = vld [vmem:[#allocation6 + $0x1c] sm:$0xf]
    %v90 = vld [vmem:[#allocation6 + $0x20] sm:$0xf]
    %v91 = vld [vmem:[#allocation6 + $0x24] sm:$0xf]
    %v92 = vld [vmem:[#allocation6 + $0x28] sm:$0xf]
    %v93 = vld [vmem:[#allocation6 + $0x2c] sm:$0xf]
    %v94 = vld [vmem:[#allocation6 + $0x30] sm:$0xf]
    %v95 = vld [vmem:[#allocation6 + $0x34] sm:$0xf]
    %v96 = vld [vmem:[#allocation6 + $0x38] sm:$0xf]
    %v97 = vld [vmem:[#allocation6 + $0x3c] sm:$0xf]
    %v98 = vld [vmem:[#allocation6 + $0x40] sm:$0xf]
    %v99 = vld [vmem:[#allocation6 + $0x44] sm:$0xf]
    %v100 = vld [vmem:[#allocation6 + $0x48] sm:$0xf]
    %v101 = vld [vmem:[#allocation6 + $0x4c] sm:$0xf]
    %v102 = vld [vmem:[#allocation6 + $0x50] sm:$0xf]
    %v103 = vld [vmem:[#allocation6 + $0x54] sm:$0xf]
    %v104 = vld [vmem:[#allocation6 + $0x58] sm:$0xf]
    %v105 = vld [vmem:[#allocation6 + $0x5c] sm:$0xf]
    %v106 = vld [vmem:[#allocation6 + $0x60] sm:$0xf]
    %v107 = vld [vmem:[#allocation6 + $0x64] sm:$0xf]
    %v108 = vld [vmem:[#allocation6 + $0x68] sm:$0xf]
    %v109 = vld [vmem:[#allocation6 + $0x6c] sm:$0xf]
    %v110 = vld [vmem:[#allocation6 + $0x70] sm:$0xf]
    %v111 = vld [vmem:[#allocation6 + $0x74] sm:$0xf]
    %v112 = vld [vmem:[#allocation6 + $0x78] sm:$0xf]
    %v113 = vld [vmem:[#allocation6 + $0x7c] sm:$0xf]
    %v146 = vunpack.c.l.b16 %v82
    %v147 = vunpack.c.l.b16 %v83
    %v148 = vunpack.c.l.b16 %v84
    %v149 = vunpack.c.l.b16 %v85
    %v150 = vunpack.c.l.b16 %v86
    %v151 = vunpack.c.l.b16 %v87
    %v152 = vunpack.c.l.b16 %v88
    %v153 = vunpack.c.l.b16 %v89
    %v154 = vunpack.c.l.b16 %v90
    %v155 = vunpack.c.l.b16 %v91
    %v156 = vunpack.c.l.b16 %v92
    %v157 = vunpack.c.l.b16 %v93
    %v158 = vunpack.c.l.b16 %v94
    %v159 = vunpack.c.l.b16 %v95
    %v160 = vunpack.c.l.b16 %v96
    %v161 = vunpack.c.l.b16 %v97
    %v162 = vunpack.c.l.b16 %v98
    %v163 = vunpack.c.l.b16 %v99
    %v164 = vunpack.c.l.b16 %v100
    %v165 = vunpack.c.l.b16 %v101
    %v166 = vunpack.c.l.b16 %v102
    %v167 = vunpack.c.l.b16 %v103
    %v168 = vunpack.c.l.b16 %v104
    %v169 = vunpack.c.l.b16 %v105
    %v170 = vunpack.c.l.b16 %v106
    %v171 = vunpack.c.l.b16 %v107
    %v172 = vunpack.c.l.b16 %v108
    %v173 = vunpack.c.l.b16 %v109
    %v174 = vunpack.c.l.b16 %v110
    %v175 = vunpack.c.l.b16 %v111
    %v176 = vunpack.c.l.b16 %v112
    %v177 = vunpack.c.l.b16 %v113
    %v178 = vpack.c.b16 %v147, %v146
    %v179 = vpack.c.b16 %v149, %v148
    %v180 = vpack.c.b16 %v151, %v150
    %v181 = vpack.c.b16 %v153, %v152
    %v182 = vpack.c.b16 %v155, %v154
    %v183 = vpack.c.b16 %v157, %v156
    %v184 = vpack.c.b16 %v159, %v158
    %v185 = vpack.c.b16 %v161, %v160
    %v186 = vpack.c.b16 %v163, %v162
    %v187 = vpack.c.b16 %v165, %v164
    %v188 = vpack.c.b16 %v167, %v166
    %v189 = vpack.c.b16 %v169, %v168
    %v190 = vpack.c.b16 %v171, %v170
    %v191 = vpack.c.b16 %v173, %v172
    %v192 = vpack.c.b16 %v175, %v174
    %v193 = vpack.c.b16 %v177, %v176
    %210 = vmatpush.bf16.msra.mxu0 %v185
    %211 = vmatpush.bf16.msra.mxu0 %v184
    %212 = vmatpush.bf16.msra.mxu0 %v183
    %213 = vmatpush.bf16.msra.mxu0 %v182
    %214 = vmatpush.bf16.msra.mxu0 %v181
    %215 = vmatpush.bf16.msra.mxu0 %v180
    %216 = vmatpush.bf16.msra.mxu0 %v179
    %217 = vmatpush.bf16.msra.mxu0 %v178
    %218 = vmatmul.bf16.gmra.mxu0 %v80
    %v219 = vpop.f32.mrf.mxu0
    %v220 = vadd.f32 0.0, %v219
    %v221 = vpop.f32.mrf.mxu0
    %v222 = vadd.f32 0.0, %v221
    %223 = vdwg.mxu0
    %224 = vmatpush.bf16.msra.mxu0 %v193
    %225 = vmatpush.bf16.msra.mxu0 %v192
    %226 = vmatpush.bf16.msra.mxu0 %v191
    %227 = vmatpush.bf16.msra.mxu0 %v190
    %228 = vmatpush.bf16.msra.mxu0 %v189
    %229 = vmatpush.bf16.msra.mxu0 %v188
    %230 = vmatpush.bf16.msra.mxu0 %v187
    %231 = vmatpush.bf16.msra.mxu0 %v186
    %232 = vmatmul.bf16.gmra.mxu0 %v81
    %v233 = vpop.f32.mrf.mxu0
    %v234 = vadd.f32 %v220, %v233
    %v235 = vpop.f32.mrf.mxu0
    %v236 = vadd.f32 %v222, %v235
    %237 = vdwg.mxu0
    %v238 = vadd.f32 %v74, %v234
    %v239 = vadd.f32 %v75, %v236
    %240 = vst [vmem:[#allocation2] sm:$0xff] %v238
    %241 = vst [vmem:[#allocation2 + $0x8] sm:$0xff] %v239
    // Predicated region
    $region38: #{tpu_custom_call.1} parent=1 // pred_check
      %p242 = pneg %p68
    $region39: #{tpu_custom_call.1} parent=1 // pred_check_branch
      %244 = sbr.rel (%p242) target = $region41
    $region40: #{tpu_custom_call.1} parent=1 // pred_region
      %v245 = vld [vmem:[#allocation2] sm:$0xff]
      %v246 = vld [vmem:[#allocation2 + $0x8] sm:$0xff]
      %v247 = vld [vmem:[%s2] sm:$0x1]
      %v249 = vperm.slane %v247, 0
      %v251 = vadd.f32 %v245, %v249
      %v252 = vadd.f32 %v246, %v249
      %v253 = vmax.f32 %v251, 0.0
      %v254 = vmax.f32 %v252, 0.0
      %v255 = vpack.c.bf16 %v254, %v253
      %v256 = vld [vmem:[#allocation8] sm:$0xf]
      %v257 = vld [vmem:[#allocation8 + $0x4] sm:$0xf]
      %v258 = vld [vmem:[#allocation8 + $0x8] sm:$0xf]
      %v259 = vld [vmem:[#allocation8 + $0xc] sm:$0xf]
      %v260 = vld [vmem:[#allocation8 + $0x10] sm:$0xf]
      %v261 = vld [vmem:[#allocation8 + $0x14] sm:$0xf]
      %v262 = vld [vmem:[#allocation8 + $0x18] sm:$0xf]
      %v263 = vld [vmem:[#allocation8 + $0x1c] sm:$0xf]
      %v264 = vld [vmem:[#allocation8 + $0x20] sm:$0xf]
      %v265 = vld [vmem:[#allocation8 + $0x24] sm:$0xf]
      %v266 = vld [vmem:[#allocation8 + $0x28] sm:$0xf]
      %v267 = vld [vmem:[#allocation8 + $0x2c] sm:$0xf]
      %v268 = vld [vmem:[#allocation8 + $0x30] sm:$0xf]
      %v269 = vld [vmem:[#allocation8 + $0x34] sm:$0xf]
      %v270 = vld [vmem:[#allocation8 + $0x38] sm:$0xf]
      %v271 = vld [vmem:[#allocation8 + $0x3c] sm:$0xf]
      %v272 = vld [vmem:[%s4] sm:$0x1]
      %v274 = vperm.slane %v272, 0
      %v292 = vunpack.c.l.b16 %v256
      %v293 = vunpack.c.l.b16 %v257
      %v294 = vunpack.c.l.b16 %v258
      %v295 = vunpack.c.l.b16 %v259
      %v296 = vunpack.c.l.b16 %v260
      %v297 = vunpack.c.l.b16 %v261
      %v298 = vunpack.c.l.b16 %v262
      %v299 = vunpack.c.l.b16 %v263
      %v300 = vunpack.c.l.b16 %v264
      %v301 = vunpack.c.l.b16 %v265
      %v302 = vunpack.c.l.b16 %v266
      %v303 = vunpack.c.l.b16 %v267
      %v304 = vunpack.c.l.b16 %v268
      %v305 = vunpack.c.l.b16 %v269
      %v306 = vunpack.c.l.b16 %v270
      %v307 = vunpack.c.l.b16 %v271
      %v308 = vpack.c.b16 %v293, %v292
      %v309 = vpack.c.b16 %v295, %v294
      %v310 = vpack.c.b16 %v297, %v296
      %v311 = vpack.c.b16 %v299, %v298
      %v312 = vpack.c.b16 %v301, %v300
      %v313 = vpack.c.b16 %v303, %v302
      %v314 = vpack.c.b16 %v305, %v304
      %v315 = vpack.c.b16 %v307, %v306
      %324 = vmatpush.bf16.msra.mxu0 %v315
      %325 = vmatpush.bf16.msra.mxu0 %v314
      %326 = vmatpush.bf16.msra.mxu0 %v313
      %327 = vmatpush.bf16.msra.mxu0 %v312
      %328 = vmatpush.bf16.msra.mxu0 %v311
      %329 = vmatpush.bf16.msra.mxu0 %v310
      %330 = vmatpush.bf16.msra.mxu0 %v309
      %331 = vmatpush.bf16.msra.mxu0 %v308
      %332 = vmatmul.bf16.gmra.mxu0 %v255
      %v333 = vpop.f32.mrf.mxu0
      %v334 = vadd.f32 %v274, %v333
      %v335 = vpop.f32.mrf.mxu0
      %v336 = vadd.f32 %v274, %v335
      %337 = vdwg.mxu0
      %v338 = vmax.f32 %v334, 0.0
      %v339 = vmax.f32 %v336, 0.0
      %340 = vst [vmem:[#allocation9] sm:$0xff] %v338
      %341 = vst [vmem:[#allocation9 + $0x8] sm:$0xff] %v339
    $region41: #{tpu_custom_call.1} parent=1 // pred_fallthru
      _
    // Predicated region
    $region42: #{tpu_custom_call.1} parent=1 // pred_check
      _
    $region43: #{tpu_custom_call.1} parent=1 // pred_check_branch
      %343 = sbr.rel (0) target = $region45
    $region44: #{tpu_custom_call.1} parent=1 // pred_region
      %345 = vsyncadd [#allocation5], 0
      %s346 = sshll.u32 [#allocation9], 4
      %s347 = int_to_ptr.vmem [resolvable:$true] %s346
      %s348 = sshll.u32 %s5, 4
      %s349 = int_to_ptr.hbm [resolvable:$true] %s348
      %354 = dma.vmem_to_hbm [thread:$0]  %s347, 256, %s349, [#allocation5], 128, 128, 8
    $region45: #{tpu_custom_call.1} parent=1 // pred_fallthru
      _
    // Predicated region
    $region46: #{tpu_custom_call.1} parent=1 // pred_check
      _
    $region47: #{tpu_custom_call.1} parent=1 // pred_check_branch
      %356 = sbr.rel (0) target = $region49
    $region48: #{tpu_custom_call.1} parent=1 // pred_region
      %358 = dma.done [#allocation5], 256
    $region49: #{tpu_custom_call.1} parent=1 // pred_fallthru
      _
    %359 = vsyncpa [#allocation4], 1
    %360 = vsyncpa [#allocation7], 1
    %361 = vsyncpa [#allocation5], 1

</llo_original>
